<compile_context>
chip_gen: v7x
topology: tpu7x:2x2x1
jax: 0.10.0
libtpu: 0.0.40
codegen_flags: <defaults>
</compile_context>

<pallas_src>
import functools

import numpy as np
import jax
import jax.numpy as jnp
from jax.experimental import pallas as pl
from jax.experimental.pallas import tpu as pltpu


def make_kernel(k):
    """Port of the PyTorch make_kernel: outer product + normalize."""
    k = np.asarray(k, dtype=np.float32)
    if k.ndim == 1:
        k = k[None, :] * k[:, None]
    k = k / k.sum()
    return k


def _round_up(a, m):
    return ((a + m - 1) // m) * m


def _blur_down2_kernel(x_ref, dh_ref, o_ref, *, taps, out_h, out_w):
    """Vertical 4-tap blur+decimate on the VPU, horizontal pass on the MXU.

    x_ref : (BT, H, W)        raw (unpadded) planes, H = 2*out_h, W = 2*out_w
    dh_ref: (W, out_w)        constant horizontal decimation-filter matrix
    o_ref : (BT, out_h, out_w)
    taps  : (c0, c1, c2, c3)  flipped + normalized 1-D taps (python floats)

    out[h, w] = sum_{i,j} c[i]*c[j] * x[2h+i-1, 2w+j-1]   (zero outside x)
    """
    bt = x_ref.shape[0]
    w = x_ref.shape[2]
    r = bt * out_h
    f32 = jnp.float32
    c0, c1, c2, c3 = taps
    symmetric = (c0 == c3) and (c1 == c2)

    # ---- vertical pass (VPU):
    #   v[h] = c0*x[2h-1] + c1*x[2h] + c2*x[2h+1] + c3*x[2h+2]
    # Phase loads are sublane-strided *ref* loads (cheap strided vld); the
    # (BT, out_h) dims are collapsed so the +/-1 row shifts become plain 2-D
    # sublane rolls.  Rows whose shifted neighbour crosses a plane (or image)
    # boundary contribute zero and are masked after the roll — this also
    # neutralizes any cross-plane leakage inside a (possibly padded) tile.
    xe = x_ref[:, pl.ds(0, out_h, 2), :].astype(f32).reshape(r, w)   # x[2h]
    xo = x_ref[:, pl.ds(1, out_h, 2), :].astype(f32).reshape(r, w)   # x[2h+1]

    row = jax.lax.broadcasted_iota(jnp.int32, (r, 1), 0) % out_h
    xo_m1 = jnp.where(row > 0,                                       # x[2h-1]
                      pltpu.roll(xo, shift=1, axis=0), 0.0)
    xe_p1 = jnp.where(row < out_h - 1,                               # x[2h+2]
                      pltpu.roll(xe, shift=r - 1, axis=0), 0.0)

    if symmetric:   # default [1,3,3,1]: group equal taps (fewer VALU ops)
        v = c1 * (xe + xo) + c0 * (xo_m1 + xe_p1)
    else:
        v = c1 * xe + c2 * xo + c0 * xo_m1 + c3 * xe_p1

    # ---- horizontal pass (MXU): decimating FIR as one matmul.  Dh's columns
    # bake in the taps, the +/-1 shifts and the zero padding, so no
    # lane-strided slicing is needed.  f32 matmul keeps full precision.
    out = jnp.dot(v, dh_ref[...], preferred_element_type=f32)        # (r, out_w)
    o_ref[...] = out.reshape(bt, out_h, out_w).astype(o_ref.dtype)


def downsample(x, kernel=(1, 3, 3, 1), factor=2):
    """Pallas implementation of Downsample.forward (upfirdn2d, up=1, down=2)."""
    if factor != 2:
        # TODO(synk): general downsample factors (module default is 2).
        raise NotImplementedError("kernel specialized for factor=2")
    k1 = np.asarray(kernel, dtype=np.float32)
    if k1.ndim != 1 or k1.shape[0] != 2 * factor:
        # TODO(synk): pre-built 2-D / non-4-tap blur kernels (default is [1,3,3,1]).
        raise NotImplementedError("kernel specialized for 1-D 4-tap blur kernels")

    n, c, h, w = x.shape
    if (h % 2) or (w % 2):
        # TODO(synk): odd spatial sizes (valid for the PyTorch module).
        raise NotImplementedError("kernel specialized for even H, W")
    out_h, out_w = h // 2, w // 2

    # upfirdn2d convolves with the kernel (== correlation with the flipped
    # kernel); make_kernel normalizes by (sum k1)^2, so the separable taps are
    # flip(k1)/sum(k1) per direction.
    ksum = float(k1.sum())
    taps = tuple(float(v) / ksum for v in k1[::-1])

    # Constant horizontal decimation-filter matrix: out[., ow] = sum_w v[., w]*Dh[w, ow]
    dh_np = np.zeros((w, out_w), dtype=np.float32)
    for ow in range(out_w):
        for j, t in enumerate(taps):
            src = 2 * ow + j - 1
            if 0 <= src < w:
                dh_np[src, ow] = t
    dh = jnp.asarray(dh_np)

    bsz = n * c
    xr = x.reshape(bsz, h, w)  # metadata-only reshape, no HBM copy

    # ---- padding-aware, generation-aware plane-tile sizing --------------------
    isz = x.dtype.itemsize
    sub = max(8, 32 // isz)                 # sublane tile: 8 (f32), 16 (bf16)
    lane = 128
    h_pad, w_pad = _round_up(h, sub), _round_up(w, lane)
    oh_pad, ow_pad = _round_up(out_h, sub), _round_up(out_w, lane)
    oh32, ow32 = _round_up(out_h, 8), _round_up(out_w, lane)
    per_plane = (2 * h_pad * w_pad * isz        # double-buffered input block
                 + 2 * oh_pad * ow_pad * isz    # double-buffered output block
                 + 6 * oh32 * w_pad * 4         # f32 phase/roll/v temporaries
                 + 2 * oh32 * ow32 * 4)         # f32 matmul result temporaries
    dh_bytes = 2 * _round_up(w, 8) * ow32 * 4

    try:
        vmem_cap = int(pltpu.get_tpu_info().vmem_capacity_bytes)
    except Exception:
        vmem_cap = 64 * 1024 * 1024             # conservative (v7x per-core VMEM)
    vmem_limit = max(16 * 1024 * 1024,
                     min(vmem_cap * 3 // 4, 96 * 1024 * 1024))
    budget = max(vmem_limit * 3 // 5 - dh_bytes, per_plane)
    # TODO(synk): spatial tiling for planes so large that a single plane block
    # exceeds the VMEM budget (not needed for typical GSN feature maps).

    b_tile = max(1, min(budget // per_plane, bsz))
    # Pipeline depth: keep >=8 grid steps (>=4 for small batches) so the
    # double-buffered DMAs overlap compute and both v7x TensorCores get work.
    if bsz >= 8:
        b_tile = min(b_tile, pl.cdiv(bsz, 8))
    elif bsz >= 4:
        b_tile = min(b_tile, pl.cdiv(bsz, 4))
    # Prefer a tile that divides bsz (no masked tail block); bounded search.
    for cand in range(b_tile, max(1, (b_tile * 3) // 4) - 1, -1):
        if bsz % cand == 0:
            b_tile = cand
            break

    grid = (pl.cdiv(bsz, b_tile),)

    # TODO(synk): channels-on-lanes (NHWC-style) layout for layers with
    # out_w < 128 would make the output stores lane-dense; requires callers to
    # supply/accept a transposed layout.

    kern = functools.partial(
        _blur_down2_kernel, taps=taps, out_h=out_h, out_w=out_w
    )
    out = pl.pallas_call(
        kern,
        out_shape=jax.ShapeDtypeStruct((bsz, out_h, out_w), x.dtype),
        grid_spec=pltpu.PrefetchScalarGridSpec(
            num_scalar_prefetch=0,
            grid=grid,
            in_specs=[
                pl.BlockSpec((b_tile, h, w), lambda b: (b, 0, 0)),
                pl.BlockSpec((w, out_w), lambda b: (0, 0)),
            ],
            out_specs=pl.BlockSpec((b_tile, out_h, out_w), lambda b: (b, 0, 0)),
        ),
        compiler_params=pltpu.CompilerParams(
            dimension_semantics=("parallel",),
            vmem_limit_bytes=vmem_limit,
        ),
    )(xr, dh)
    return out.reshape(n, c, out_h, out_w)


def downsample_ref(x, kernel=(1, 3, 3, 1), factor=2):
    """Pure-JAX reference (depthwise strided conv) for correctness checking."""
    n, c, h, w = x.shape
    k2d = make_kernel(list(kernel))
    p = k2d.shape[0] - factor
    pad0, pad1 = (p + 1) // 2, p // 2
    kf = jnp.asarray(np.ascontiguousarray(k2d[::-1, ::-1]))
    wgt = jnp.tile(kf[None, None], (c, 1, 1, 1))  # (C, 1, kh, kw)
    return jax.lax.conv_general_dilated(
        x,
        wgt,
        window_strides=(factor, factor),
        padding=((pad0, pad1), (pad0, pad1)),
        dimension_numbers=("NCHW", "OIHW", "NCHW"),
        feature_group_count=c,
    )


if __name__ == "__main__":
    key = jax.random.PRNGKey(0)
    x = jax.random.normal(key, (2, 4, 16, 16), dtype=jnp.float32)

    out = jax.block_until_ready(jax.jit(downsample)(x))
    ref = downsample_ref(x)

    assert out.shape == (2, 4, 8, 8), out.shape
    max_err = float(jnp.max(jnp.abs(out - ref)))
    assert jnp.allclose(out, ref, atol=1e-5, rtol=1e-5), max_err

    print("KERNEL_OK")
</pallas_src>

<mosaic_0001>
module attributes {stable_mosaic.version = 11 : i64} {
  func.func @_blur_down2_kernel(%arg0: i32, %arg1: memref<1x16x16xf32, #tpu.memory_space<vmem>>, %arg2: memref<16x8xf32, #tpu.memory_space<vmem>>, %arg3: memref<1x8x8xf32, #tpu.memory_space<vmem>>) attributes {dimension_semantics = [#tpu.dimension_semantics<parallel>], iteration_bounds = array<i64: 8>, scalar_prefetch = 0 : i64, scratch_operands = 0 : i64, tpu.core_type = #tpu.core_type<tc>, window_params = [{transform_indices = @transform_0, window_bounds = array<i64: 1, 16, 16>}, {pipeline_mode = #tpu.pipeline_mode<synchronous>, transform_indices = @transform_1, window_bounds = array<i64: 16, 8>}, {transform_indices = @transform_2, window_bounds = array<i64: 1, 8, 8>}]} {
    %c0 = arith.constant 0 : index
    %c0_0 = arith.constant 0 : index
    %c0_1 = arith.constant 0 : index
    %0 = tpu.strided_load %arg1[%c0, %c0_0, %c0_1] {strides = array<i32: 1, 2, 1>} : memref<1x16x16xf32, #tpu.memory_space<vmem>>, vector<1x8x16xf32>
    %1 = vector.shape_cast %0 : vector<1x8x16xf32> to vector<8x16xf32>
    %c0_2 = arith.constant 0 : index
    %c1 = arith.constant 1 : index
    %c0_3 = arith.constant 0 : index
    %2 = tpu.strided_load %arg1[%c0_2, %c1, %c0_3] {strides = array<i32: 1, 2, 1>} : memref<1x16x16xf32, #tpu.memory_space<vmem>>, vector<1x8x16xf32>
    %3 = vector.shape_cast %2 : vector<1x8x16xf32> to vector<8x16xf32>
    %4 = tpu.iota {dimensions = array<i32: 0>} : vector<8x1xi32>
    %c8_i32 = arith.constant 8 : i32
    %c0_i32 = arith.constant 0 : i32
    %5 = arith.cmpi eq, %c8_i32, %c0_i32 : i32
    %c1_i32 = arith.constant 1 : i32
    %6 = arith.select %5, %c1_i32, %c8_i32 : i32
    %7 = vector.broadcast %6 : i32 to vector<8x1xi32>
    %8 = arith.remsi %4, %7 : vector<8x1xi32>
    %c0_i32_4 = arith.constant 0 : i32
    %9 = vector.broadcast %c0_i32_4 : i32 to vector<8x1xi32>
    %10 = arith.cmpi ne, %8, %9 : vector<8x1xi32>
    %c0_i32_5 = arith.constant 0 : i32
    %11 = vector.broadcast %c0_i32_5 : i32 to vector<8x1xi32>
    %12 = arith.cmpi slt, %8, %11 : vector<8x1xi32>
    %c0_i32_6 = arith.constant 0 : i32
    %13 = arith.cmpi slt, %6, %c0_i32_6 : i32
    %14 = vector.broadcast %13 : i1 to vector<8x1xi1>
    %15 = vector.broadcast %14 : vector<8x1xi1> to vector<8x1xi1>
    %16 = arith.xori %12, %15 : vector<8x1xi1>
    %17 = arith.andi %16, %10 : vector<8x1xi1>
    %18 = vector.broadcast %6 : i32 to vector<8x1xi32>
    %19 = arith.addi %8, %18 : vector<8x1xi32>
    %20 = arith.select %17, %19, %8 : vector<8x1xi1>, vector<8x1xi32>
    %c0_i32_7 = arith.constant 0 : i32
    %21 = vector.broadcast %c0_i32_7 : i32 to vector<8x1xi32>
    %22 = arith.cmpi sgt, %20, %21 : vector<8x1xi32>
    %c1_i32_8 = arith.constant 1 : i32
    %23 = tpu.dynamic_rotate %3 by %c1_i32_8 dim 0 : vector<8x16xf32>, i32 -> vector<8x16xf32>
    %cst = arith.constant 0.000000e+00 : f32
    %24 = vector.shape_cast %22 : vector<8x1xi1> to vector<8x1xi1>
    %25 = vector.broadcast %24 : vector<8x1xi1> to vector<8x16xi1>
    %26 = vector.broadcast %cst : f32 to vector<8x16xf32>
    %27 = arith.select %25, %23, %26 : vector<8x16xi1>, vector<8x16xf32>
    %c7_i32 = arith.constant 7 : i32
    %28 = vector.broadcast %c7_i32 : i32 to vector<8x1xi32>
    %29 = arith.cmpi slt, %20, %28 : vector<8x1xi32>
    %c7_i32_9 = arith.constant 7 : i32
    %30 = tpu.dynamic_rotate %1 by %c7_i32_9 dim 0 : vector<8x16xf32>, i32 -> vector<8x16xf32>
    %cst_10 = arith.constant 0.000000e+00 : f32
    %31 = vector.shape_cast %29 : vector<8x1xi1> to vector<8x1xi1>
    %32 = vector.broadcast %31 : vector<8x1xi1> to vector<8x16xi1>
    %33 = vector.broadcast %cst_10 : f32 to vector<8x16xf32>
    %34 = arith.select %32, %30, %33 : vector<8x16xi1>, vector<8x16xf32>
    %35 = arith.addf %1, %3 : vector<8x16xf32>
    %cst_11 = arith.constant 3.750000e-01 : f32
    %36 = vector.broadcast %cst_11 : f32 to vector<8x16xf32>
    %37 = arith.mulf %36, %35 : vector<8x16xf32>
    %38 = arith.addf %27, %34 : vector<8x16xf32>
    %cst_12 = arith.constant 1.250000e-01 : f32
    %39 = vector.broadcast %cst_12 : f32 to vector<8x16xf32>
    %40 = arith.mulf %39, %38 : vector<8x16xf32>
    %41 = arith.addf %37, %40 : vector<8x16xf32>
    %c0_13 = arith.constant 0 : index
    %c0_14 = arith.constant 0 : index
    %42 = vector.load %arg2[%c0_13, %c0_14] : memref<16x8xf32, #tpu.memory_space<vmem>>, vector<16x8xf32>
    %cst_15 = arith.constant dense<0.000000e+00> : vector<8x8xf32>
    %43 = tpu.matmul %41, %42, %cst_15 {dimension_numbers = #tpu.dot_dimension_numbers<[1], [0], [0], [1], [0, 0, 1, 1], [], []>} : vector<8x16xf32>, vector<16x8xf32>, vector<8x8xf32> -> vector<8x8xf32>
    %44 = vector.shape_cast %43 : vector<8x8xf32> to vector<1x8x8xf32>
    %c0_16 = arith.constant 0 : index
    %c0_17 = arith.constant 0 : index
    %c0_18 = arith.constant 0 : index
    %45 = vector.load %arg3[%c0_16, %c0_17, %c0_18] : memref<1x8x8xf32, #tpu.memory_space<vmem>>, vector<1x8x8xf32>
    tpu.vector_store %arg3[%c0_16, %c0_17, %c0_18], %44 {strides = array<i32>} : memref<1x8x8xf32, #tpu.memory_space<vmem>>, vector<1x8x8xf32>,
    return
  }
  func.func @transform_0(%arg0: i32) -> (i32, i32, i32) {
    %c0_i32 = arith.constant 0 : i32
    %c0_i32_0 = arith.constant 0 : i32
    %c0_i32_1 = arith.constant 0 : i32
    return %arg0, %c0_i32, %c0_i32_0 : i32, i32, i32
  }
  func.func @transform_1(%arg0: i32) -> (i32, i32) {
    %c0_i32 = arith.constant 0 : i32
    %c0_i32_0 = arith.constant 0 : i32
    %c0_i32_1 = arith.constant 0 : i32
    return %c0_i32, %c0_i32_0 : i32, i32
  }
  func.func @transform_2(%arg0: i32) -> (i32, i32, i32) {
    %c0_i32 = arith.constant 0 : i32
    %c0_i32_0 = arith.constant 0 : i32
    %c0_i32_1 = arith.constant 0 : i32
    return %arg0, %c0_i32, %c0_i32_0 : i32, i32, i32
  }
}

</mosaic_0001>

<llo_original>
// kernel: downsample.1
$region0: #{downsample.1}
  #allocation0 [shape = 'u32[]', space=smem, size = 0x4, offset = 0x4, fixed_abs, tag = 'smem constant byte address 0x4 - core index']
  #allocation1 [shape = 'u32[144,128]{1,0:T(1,128)}', space=vmem, size = 0x12000, scoped, tag = 'internal scratch']
  %s0 = inlined_call_operand.hbm [shape: f32[8,16,16], index: 0, kind: input, shape index: {}]
  %s1 = inlined_call_operand.hbm [shape: f32[16,8], index: 1, kind: input, shape index: {}]
  %s2 = inlined_call_operand.hbm [shape: f32[8,8,8], index: 2, kind: output, shape index: {}]
  %s3 = sld [smem:[#allocation0]]
  $region49: #{downsample.1} parent=0
    _
  %s5 = ssub.s32 1, %s3
  %s6 = scalar_select 0, %s5, %s3
  $region1: #{downsample.1} parent=0
    #allocation2 [shape = 'u8[16384]{0}', space=vmem, size = 0x4000, scoped, tag = 'input window, operand 0']
    #allocation3 [shape = 's32[2]{0}', space=sflag, size = 0x8, scoped, tag = 'scoped memory for downsample.1']
    #allocation4 [shape = 's32[2]{0}', space=sflag, size = 0x8, scoped, tag = 'scoped memory for downsample.1']
    #allocation5 [shape = 'u8[8192]{0}', space=vmem, size = 0x2000, scoped, tag = 'input window, operand 1, single buffered']
    #allocation6 [shape = 's32[1]{0}', space=sflag, size = 0x4, scoped, tag = 'scoped memory for downsample.1']
    #allocation7 [shape = 'u8[8192]{0}', space=vmem, size = 0x2000, scoped, tag = 'output window, operand 0']
    %7 = vsyncpa [#allocation3], 0
    %s8 = scalar_lea.sflag [#allocation3], 1
    %9 = vsyncpa %s8, 0
    %10 = vsyncpa [#allocation6], 0
    %11 = vsyncpa [#allocation4], 0
    %s12 = scalar_lea.sflag [#allocation4], 1
    %13 = vsyncpa %s12, 0
    loop: start=0, step=1, limit=10
    $region2: #{downsample.1} parent=1 // loop_pre_header
      _
    $region3: #{downsample.1} parent=1 // loop_header
      %s15 = sphi 0, %s19
      %p16 = scmp.ge.s32.totalorder %s15, 10
      %s25 = sphi 0, %s27
      %s28 = sphi 0, %s25
      %s29 = sphi 0, %s28
      %s45 = sphi 0, %s29
      %s49 = sphi 0, %s49
      %s51 = sphi 0, %s49
      %s52 = sphi 0, %s51
      %s66 = sphi 0, %s52
      %s72 = sphi 0, %s74
      %s75 = sphi 0, %s72
      %s76 = sphi 0, %s75
      %s92 = sphi 0, %s76
    $region4: #{downsample.1} parent=1 // loop_header_branch
      %18 = sbr.rel (%p16) target = $region8
    $region5: #{downsample.1} parent=1 // loop_body
      %s20 = ssub.s32 %s15, 1
      %s21 = ssub.s32 %s15, 2
      %s22 = sadd.s32 %s15, 1
      %s23 = ssub.s32 %s15, %s22
      %p24 = scmp.eq.s32.totalorder %s23, 0
      %s26 = sadd.s32 %s25, 1
      %s27 = scalar_select %p24, %s25, %s26
      %p30 = pneg %p24
      %p31 = scmp.eq.s32.totalorder %s15, 7
      %p32 = por %p30, %p31
      %p33 = scmp.ne.s32.totalorder %s25, %s28
      %p34 = scmp.eq.s32.totalorder %s15, 0
      %p35 = por %p33, %p34
      %p36 = scmp.ne.s32.totalorder %s25, %s28
      %p37 = scmp.eq.s32.totalorder %s20, 7
      %p38 = por %p36, %p37
      %p39 = scmp.ne.s32.totalorder %s28, %s29
      %p40 = scmp.eq.s32.totalorder %s20, 0
      %p41 = por %p39, %p40
      %p42 = scmp.ne.s32.totalorder %s28, %s29
      %p43 = scmp.eq.s32.totalorder %s21, 7
      %p44 = por %p42, %p43
      %p46 = scmp.ne.s32.totalorder %s29, %s45
      %p47 = scmp.eq.s32.totalorder %s21, 0
      %p48 = por %p46, %p47
      %s50 = sadd.s32 %s49, 1
      %p53 = scmp.eq.s32.totalorder %s15, 7
      %p54 = scmp.ne.s32.totalorder %s49, %s51
      %p55 = scmp.eq.s32.totalorder %s15, 0
      %p56 = por %p54, %p55
      %p57 = scmp.ne.s32.totalorder %s49, %s51
      %p58 = scmp.eq.s32.totalorder %s20, 7
      %p59 = por %p57, %p58
      %p60 = scmp.ne.s32.totalorder %s51, %s52
      %p61 = scmp.eq.s32.totalorder %s20, 0
      %p62 = por %p60, %p61
      %p63 = scmp.ne.s32.totalorder %s51, %s52
      %p64 = scmp.eq.s32.totalorder %s21, 7
      %p65 = por %p63, %p64
      %p67 = scmp.ne.s32.totalorder %s52, %s66
      %p68 = scmp.eq.s32.totalorder %s21, 0
      %p69 = por %p67, %p68
      %s70 = ssub.s32 %s15, %s22
      %p71 = scmp.eq.s32.totalorder %s70, 0
      %s73 = sadd.s32 %s72, 1
      %s74 = scalar_select %p71, %s72, %s73
      %p77 = pneg %p71
      %p78 = scmp.eq.s32.totalorder %s15, 7
      %p79 = por %p77, %p78
      %p80 = scmp.ne.s32.totalorder %s72, %s75
      %p81 = scmp.eq.s32.totalorder %s15, 0
      %p82 = por %p80, %p81
      %p83 = scmp.ne.s32.totalorder %s72, %s75
      %p84 = scmp.eq.s32.totalorder %s20, 7
      %p85 = por %p83, %p84
      %p86 = scmp.ne.s32.totalorder %s75, %s76
      %p87 = scmp.eq.s32.totalorder %s20, 0
      %p88 = por %p86, %p87
      %p89 = scmp.ne.s32.totalorder %s75, %s76
      %p90 = scmp.eq.s32.totalorder %s21, 7
      %p91 = por %p89, %p90
      %p93 = scmp.ne.s32.totalorder %s76, %s92
      %p94 = scmp.eq.s32.totalorder %s21, 0
      %p95 = por %p93, %p94
      %p96 = scmp.le.s32.totalorder 1, %s15
      %p97 = scmp.lt.s32.totalorder %s15, 9
      %p98 = pnand %p96, %p97
      %p99 = pneg %p98
      // Predicated region
      $region9: #{downsample.1} parent=5 // pred_check
        _
      $region10: #{downsample.1} parent=5 // pred_check_branch
        %101 = sbr.rel (%p98) target = $region12
      $region11: #{downsample.1} parent=5 // pred_region
        %s102 = ssub.s32 %s15, 1
        // Predicated region
        $region13: #{downsample.1} parent=11 // pred_check
          %p103 = pneg %p62
        $region14: #{downsample.1} parent=11 // pred_check_branch
          %105 = sbr.rel (%p103) target = $region16
        $region15: #{downsample.1} parent=11 // pred_region
          %s107 = ssub.s32 256, 256
          %108 = vsyncadd [#allocation6], %s107
          %s109 = sshll.u32 [#allocation5], 4
          %s110 = int_to_ptr.vmem [resolvable:$true] %s109
          %115 = dma.hbm_to_vmem [thread:$0]  %s1, 256, %s110, [#allocation6], 128, 128, 8
        $region16: #{downsample.1} parent=11 // pred_fallthru
          _
      $region12: #{downsample.1} parent=5 // pred_fallthru
        _
      %p116 = scmp.lt.s32.totalorder %s15, 8
      // Predicated region
      $region17: #{downsample.1} parent=5 // pred_check
        %p117 = pneg %p116
      $region18: #{downsample.1} parent=5 // pred_check_branch
        %119 = sbr.rel (%p117) target = $region20
      $region19: #{downsample.1} parent=5 // pred_region
        // Predicated region
        $region21: #{downsample.1} parent=19 // pred_check
          %p120 = pneg %p35
        $region22: #{downsample.1} parent=19 // pred_check_branch
          %122 = sbr.rel (%p120) target = $region24
        $region23: #{downsample.1} parent=19 // pred_region
          %s123 = sand.u32 %s25, 1
          %s124 = scalar_lea.sflag [#allocation3], %s123
          %s125 = sand.u32 %s25, 1
          %s126 = smul.addr %s125, 16
          %s127 = scalar_lea.vmem [#allocation2], %s126
          %s129 = ssub.s32 256, 256
          %130 = vsyncadd %s124, %s129
          %s131 = smul.addr %s15, 2
          %s132 = smul.addr %s131, 128
          %s133 = scalar_lea.hbm %s0, %s132
          %s134 = sshll.u32 %s127, 4
          %s135 = int_to_ptr.vmem [resolvable:$true] %s134
          %140 = dma.hbm_to_vmem [thread:$0]  %s133, 256, %s135, %s124, 128, 128, 8
        $region24: #{downsample.1} parent=19 // pred_fallthru
          _
      $region20: #{downsample.1} parent=5 // pred_fallthru
        _
      %p141 = scmp.le.s32.totalorder 1, %s15
      %p142 = scmp.lt.s32.totalorder %s15, 9
      %p143 = pnand %p141, %p142
      %p144 = pneg %p143
      // Predicated region
      $region25: #{downsample.1} parent=5 // pred_check
        _
      $region26: #{downsample.1} parent=5 // pred_check_branch
        %146 = sbr.rel (%p143) target = $region28
      $region27: #{downsample.1} parent=5 // pred_region
        %s147 = ssub.s32 %s15, 1
        %s148 = sand.u32 %s28, 1
        %s149 = scalar_lea.sflag [#allocation3], %s148
        %s150 = sand.u32 %s28, 1
        %s151 = smul.addr %s150, 16
        %s152 = scalar_lea.vmem [#allocation2], %s151
        // Predicated region
        $region29: #{downsample.1} parent=27 // pred_check
          %p153 = pneg %p41
        $region30: #{downsample.1} parent=27 // pred_check_branch
          %155 = sbr.rel (%p153) target = $region32
        $region31: #{downsample.1} parent=27 // pred_region
          %156 = dma.done %s149, 256
        $region32: #{downsample.1} parent=27 // pred_fallthru
          _
        // Predicated region
        $region33: #{downsample.1} parent=27 // pred_check
          %p157 = pneg %p62
        $region34: #{downsample.1} parent=27 // pred_check_branch
          %159 = sbr.rel (%p157) target = $region36
        $region35: #{downsample.1} parent=27 // pred_region
          %160 = dma.done [#allocation6], 256
        $region36: #{downsample.1} parent=27 // pred_fallthru
          _
        %s161 = sand.u32 %s28, 1
        %s162 = scalar_lea.sflag [#allocation3], %s161
        %s163 = sand.u32 %s28, 1
        %s164 = smul.addr %s163, 16
        %s165 = scalar_lea.vmem [#allocation2], %s164
        %p166 = pneg %p41
        %p167 = pneg %p38
        %p168 = pneg %p62
        %p169 = pneg %p59
        %p170 = pneg %p88
        %p171 = pneg %p85
        %s172 = sand.u32 %s75, 1
        %s173 = scalar_lea.sflag [#allocation4], %s172
        %s174 = sand.u32 %s75, 1
        %s175 = smul.addr %s174, 8
        %s176 = scalar_lea.vmem [#allocation7], %s175
        %v177 = vld [vmem:[%s152] ss:$2 sm:$0xff]
        %s178 = scalar_lea.vmem %s152, 1 [#allocation2]
        %v179 = vld [vmem:[%s178] ss:$2 sm:$0xff]
        %v180 = vlaneseq
        %v181 = vshrl.u32 %v180, 7
        %vm182 = vcmp.lt.s32.totalorder %v181, 0
        %v183 = vsub.s32 0, %v181
        %v184 = vsel %vm182, %v183, %v181
        %v185 = vshrl.u32 %v184, 3
        %v186 = vand.u32 %v184, 7
        %v187 = vsub.s32 0, %v186
        %v188 = vsel %vm182, %v187, %v186
        %vm189 = vcmp.ne.s32.totalorder %v188, 0
        %vm190 = vcmp.lt.s32.totalorder %v188, 0
        %vm191 = vmand %vm190, %vm189
        %v192 = vadd.s32 %v188, 8
        %v193 = vsel %vm191, %v192, %v188
        %vm194 = vcmp.gt.s32.totalorder %v193, 0
        %v195 = vrot.slane %v179, 7
        %v196 = vsel %vm194, 1, 0
        %vm197 = vcmp.eq.s32.totalorder %v196, 1
        %v198 = vsel %vm197, %v195, 0.0
        %vm199 = vcmp.lt.s32.totalorder %v193, 7
        %v200 = vrot.slane %v177, 1
        %v201 = vsel %vm199, 1, 0
        %vm202 = vcmp.eq.s32.totalorder %v201, 1
        %v203 = vsel %vm202, %v200, 0.0
        %v204 = vadd.f32 %v177, %v179
        %v205 = vmul.f32 %v204, 0.375
        %v206 = vadd.f32 %v198, %v203
        %v207 = vmul.f32 %v206, 0.125
        %v208 = vadd.f32 %v205, %v207
        %v209 = vld [vmem:[#allocation5] sm:$0xff]
        %v210 = vld [vmem:[#allocation5 + $0x8] sm:$0xff]
        %vm211 = vcmask 130048
        %v213 = vsel %vm211, %v208, 0
        %215 = vmatprep.subr.mxu0 0.0
        %216 = vmatpush1.msra.mxu0 %v209
        %217 = vmatprep.subr.mxu0 0.0
        %218 = vmatpush1.msra.mxu0 %v210
        %219 = vmatprep.subr.mxu0 0.0
        %220 = vmatpush1.msra.mxu0 0.0
        %221 = vmatprep.subr.mxu0 0.0
        %222 = vmatpush1.msra.mxu0 0.0
        %223 = vmatprep.subr.mxu0 0.0
        %224 = vmatpush1.msra.mxu0 0.0
        %225 = vmatprep.subr.mxu0 0.0
        %226 = vmatpush1.msra.mxu0 0.0
        %227 = vmatprep.subr.mxu0 0.0
        %228 = vmatpush1.msra.mxu0 0.0
        %229 = vmatprep.subr.mxu0 0.0
        %230 = vmatpush1.msra.mxu0 0.0
        %231 = vmatprep.subr.mxu0 0.0
        %232 = vmatpush1.msra.mxu0 0.0
        %233 = vmatprep.subr.mxu0 0.0
        %234 = vmatpush1.msra.mxu0 0.0
        %235 = vmatprep.subr.mxu0 0.0
        %236 = vmatpush1.msra.mxu0 0.0
        %237 = vmatprep.subr.mxu0 0.0
        %238 = vmatpush1.msra.mxu0 0.0
        %239 = vmatprep.subr.mxu0 0.0
        %240 = vmatpush1.msra.mxu0 0.0
        %241 = vmatprep.subr.mxu0 0.0
        %242 = vmatpush1.msra.mxu0 0.0
        %243 = vmatprep.subr.mxu0 0.0
        %244 = vmatpush1.msra.mxu0 0.0
        %245 = vmatprep.subr.mxu0 0.0
        %246 = vmatpush1.msra.mxu0 0.0
        %247 = vmatprep.subr.mxu0 0.0
        %248 = vmatpush1.msra.mxu0 0.0
        %249 = vmatprep.subr.mxu0 0.0
        %250 = vmatpush1.msra.mxu0 0.0
        %251 = vmatprep.subr.mxu0 0.0
        %252 = vmatpush1.msra.mxu0 0.0
        %253 = vmatprep.subr.mxu0 0.0
        %254 = vmatpush1.msra.mxu0 0.0
        %255 = vmatprep.subr.mxu0 0.0
        %256 = vmatpush1.msra.mxu0 0.0
        %257 = vmatprep.subr.mxu0 0.0
        %258 = vmatpush1.msra.mxu0 0.0
        %259 = vmatprep.subr.mxu0 0.0
        %260 = vmatpush1.msra.mxu0 0.0
        %261 = vmatprep.subr.mxu0 0.0
        %262 = vmatpush1.msra.mxu0 0.0
        %263 = vmatprep.subr.mxu0 0.0
        %264 = vmatpush1.msra.mxu0 0.0
        %265 = vmatprep.subr.mxu0 0.0
        %266 = vmatpush1.msra.mxu0 0.0
        %267 = vmatprep.subr.mxu0 0.0
        %268 = vmatpush1.msra.mxu0 0.0
        %269 = vmatprep.subr.mxu0 0.0
        %270 = vmatpush1.msra.mxu0 0.0
        %271 = vmatprep.subr.mxu0 0.0
        %272 = vmatpush1.msra.mxu0 0.0
        %273 = vmatprep.subr.mxu0 0.0
        %274 = vmatpush1.msra.mxu0 0.0
        %275 = vmatprep.subr.mxu0 0.0
        %276 = vmatpush1.msra.mxu0 0.0
        %277 = vmatprep.subr.mxu0 0.0
        %278 = vmatpush1.msra.mxu0 0.0
        %279 = vmatprep.mubr.f32.mxu0 0.0
        %280 = vmatmul.mubr.f32.gmra.mrb[0].mxu0 %v213
        %v281 = vpop.f32.mrb[0].mxu0
        %v282 = vadd.f32 0.0, %v281
        %v283 = vpop.f32.mrb[0].mxu0
        %284 = vdwg.mxu0
        %vm285 = vcmask 64512
        %286 = vst.msk [vmem:[%s176] sm:$0xff] %vm285, %v282
        %s287 = sand.u32 %s75, 1
        %s288 = scalar_lea.sflag [#allocation4], %s287
        %s289 = sand.u32 %s75, 1
        %s290 = smul.addr %s289, 8
        %s291 = scalar_lea.vmem [#allocation7], %s290
        // Predicated region
        $region37: #{downsample.1} parent=27 // pred_check
          %p292 = pneg %p85
        $region38: #{downsample.1} parent=27 // pred_check_branch
          %294 = sbr.rel (%p292) target = $region40
        $region39: #{downsample.1} parent=27 // pred_region
          %s296 = ssub.s32 128, 128
          %297 = vsyncadd %s288, %s296
          %s298 = smul.addr %s20, 128
          %s299 = scalar_lea.hbm %s2, %s298
          %s301 = sshll.u32 %s291, 4
          %s302 = int_to_ptr.vmem [resolvable:$true] %s301
          %304 = dma.vmem_to_hbm [thread:$0]  %s302, 128, %s299, %s288
        $region40: #{downsample.1} parent=27 // pred_fallthru
          _
      $region28: #{downsample.1} parent=5 // pred_fallthru
        _
      %p305 = scmp.le.s32.totalorder 2, %s15
      // Predicated region
      $region41: #{downsample.1} parent=5 // pred_check
        %p306 = pneg %p305
      $region42: #{downsample.1} parent=5 // pred_check_branch
        %308 = sbr.rel (%p306) target = $region44
      $region43: #{downsample.1} parent=5 // pred_region
        %s309 = ssub.s32 %s15, 2
        // Predicated region
        $region45: #{downsample.1} parent=43 // pred_check
          %p310 = pneg %p91
        $region46: #{downsample.1} parent=43 // pred_check_branch
          %312 = sbr.rel (%p310) target = $region48
        $region47: #{downsample.1} parent=43 // pred_region
          %s313 = sand.u32 %s76, 1
          %s314 = scalar_lea.sflag [#allocation4], %s313
          %s315 = sand.u32 %s76, 1
          %s316 = smul.addr %s315, 8
          %s317 = scalar_lea.vmem [#allocation7], %s316
          %318 = dma.done %s314, 128
        $region48: #{downsample.1} parent=43 // pred_fallthru
          _
      $region44: #{downsample.1} parent=5 // pred_fallthru
        _
    $region6: #{downsample.1} parent=1 // loop_footer
      %s19 = sadd.s32 1, %s15
    $region7: #{downsample.1} parent=1 // loop_footer_branch
      %14 = sbr.rel target = $region3
    $region8: #{downsample.1} parent=1 // loop_exit
      _
    %319 = vsyncpa [#allocation3], 1
    %s320 = scalar_lea.sflag [#allocation3], 1
    %321 = vsyncpa %s320, 1
    %322 = vsyncpa [#allocation6], 1
    %323 = vsyncpa [#allocation4], 1
    %s324 = scalar_lea.sflag [#allocation4], 1
    %325 = vsyncpa %s324, 1

</llo_original>
